<compile_context>
chip_gen: v5e
topology: v5e:2x2
jax: 0.10.0
libtpu: 0.0.40
codegen_flags: <defaults>
</compile_context>

<pallas_src>
import jax
import jax.numpy as jnp
from jax.experimental import pallas as pl
from jax.experimental.pallas import tpu as pltpu

INPUT_DIM = 12
HIDDEN_DIM = 64
OUTPUT_DIM = 1

# Default batch tile (lanes).  At 32768 the per-tile working set
# (2x double-buffered x tiles + (64, tb) f32 activations + output) is ~22 MiB,
# inside the default scoped-VMEM limit on every generation including v7x.
DEFAULT_BLOCK_B = 32768


def _round_up(n, m):
    return ((n + m - 1) // m) * m


def _choose_tile(batch, block_b):
    """Pick (tile, n_tiles): 128-lane-multiple tiles, balanced so padding stays
    < 128*n_tiles, and >= 2 tiles whenever possible so the "parallel" grid axis
    can shard across both v7x TensorCores."""
    b128 = _round_up(batch, 128)
    tb_max = min(_round_up(block_b, 128), b128)
    n = pl.cdiv(b128, tb_max)
    if n == 1 and b128 >= 256:
        n = 2                                   # v7x megacore: give both TCs work
    tb = _round_up(pl.cdiv(b128, n), 128)       # balanced tiles, minimal padding
    n = pl.cdiv(b128, tb)
    return tb, n


def _pinn_kernel(x_ref, w1_ref, b1_ref, w2_ref, b2_ref, o_ref):
    # x_ref:  (INPUT_DIM, TB)          batch on lanes
    # w1_ref: (HIDDEN_DIM, INPUT_DIM)  resident
    # b1_ref: (HIDDEN_DIM, 1)          resident, broadcasts over lanes
    # w2_ref: (OUTPUT_DIM, HIDDEN_DIM) resident row (native PyTorch shape)
    # b2_ref: (1, 1)                   resident
    # o_ref:  (OUTPUT_DIM, TB)         lane-dense output tile
    x = x_ref[...]

    # Layer 1 on the MXU (f32 accumulate); bias + ReLU on the VPU.
    h = jnp.dot(w1_ref[...], x, preferred_element_type=jnp.float32)
    h = jnp.maximum(h + b1_ref[...], 0.0)

    # Layer 2 also on the MXU (single result row).  The kernel is VALU-bound on
    # v6e/v7x, so the reduction goes to the otherwise-idle MXU slot instead of
    # the VPU/XLU.
    y = jnp.dot(w2_ref[...], h, preferred_element_type=jnp.float32) + b2_ref[...]
    o_ref[...] = y.astype(o_ref.dtype)


def pinn_forward_feature_major(x_fm, w1, b1, w2, b2, *, block_b=DEFAULT_BLOCK_B):
    """Primary (fast) entry point.

    x_fm: (INPUT_DIM, B) feature-major input -- produce x in this layout
    upstream so no transpose pass over x is ever materialized.
    Returns (B, OUTPUT_DIM).
    """
    batch = x_fm.shape[1]
    tb, n_tiles = _choose_tile(batch, block_b)
    b_pad = tb * n_tiles

    # Pad only for ragged batches; for tile multiples this is a no-op and x_fm
    # feeds the kernel straight from HBM (no extra pass).
    x_p = x_fm if b_pad == batch else jnp.pad(x_fm, ((0, 0), (0, b_pad - batch)))

    b1_col = b1.reshape(HIDDEN_DIM, 1)          # (64, 1)
    w2_row = w2.reshape(OUTPUT_DIM, HIDDEN_DIM)  # (1, 64) -- PyTorch-native
    b2_2d = b2.reshape(1, 1)                    # (1, 1)

    # Raise the scoped-VMEM limit only when the tile actually needs it.
    est_vmem = 4 * tb * (2 * INPUT_DIM + 2 * HIDDEN_DIM + 2 * OUTPUT_DIM) + (4 << 20)
    params = dict(dimension_semantics=("parallel",))
    if est_vmem > (30 << 20):
        params["vmem_limit_bytes"] = int(min(est_vmem, 60 << 20))

    out2d = pl.pallas_call(
        _pinn_kernel,
        out_shape=jax.ShapeDtypeStruct((OUTPUT_DIM, b_pad), x_fm.dtype),
        grid=(n_tiles,),
        in_specs=[
            pl.BlockSpec((INPUT_DIM, tb), lambda i: (0, i)),           # x tile
            pl.BlockSpec((HIDDEN_DIM, INPUT_DIM), lambda i: (0, 0)),   # w1 resident
            pl.BlockSpec((HIDDEN_DIM, 1), lambda i: (0, 0)),           # b1 resident
            pl.BlockSpec((OUTPUT_DIM, HIDDEN_DIM), lambda i: (0, 0)),  # w2 resident
            pl.BlockSpec((1, 1), lambda i: (0, 0)),                    # b2 resident
        ],
        out_specs=pl.BlockSpec((OUTPUT_DIM, tb), lambda i: (0, i)),
        compiler_params=pltpu.CompilerParams(**params),
    )(x_p, w1, b1_col, w2_row, b2_2d)

    # (1, b_pad) -> (b_pad, 1) is a free row-major reshape (no transpose pass);
    # the slice copies only output bytes and only when the batch was padded.
    out = out2d.reshape(b_pad, OUTPUT_DIM)
    return out if b_pad == batch else out[:batch]


def pinn_forward(x, w1, b1, w2, b2, *, block_b=DEFAULT_BLOCK_B):
    """PyTorch-convention wrapper: x is (B, INPUT_DIM), returns (B, OUTPUT_DIM).

    Kept for module-semantics compatibility; it pays one transpose pass over x.
    Prefer producing x feature-major upstream and calling
    pinn_forward_feature_major directly.
    """
    return pinn_forward_feature_major(x.T, w1, b1, w2, b2, block_b=block_b)


def init_params(key):
    """Deterministic init mimicking nn.Linear (uniform +/- 1/sqrt(fan_in))."""
    k1, k2, k3, k4 = jax.random.split(key, 4)
    bound1 = 1.0 / jnp.sqrt(INPUT_DIM)
    bound2 = 1.0 / jnp.sqrt(HIDDEN_DIM)
    w1 = jax.random.uniform(k1, (HIDDEN_DIM, INPUT_DIM), jnp.float32,
                            -bound1, bound1)
    b1 = jax.random.uniform(k2, (HIDDEN_DIM,), jnp.float32, -bound1, bound1)
    w2 = jax.random.uniform(k3, (OUTPUT_DIM, HIDDEN_DIM), jnp.float32,
                            -bound2, bound2)
    b2 = jax.random.uniform(k4, (OUTPUT_DIM,), jnp.float32, -bound2, bound2)
    return w1, b1, w2, b2


def _reference(x, w1, b1, w2, b2):
    return jnp.maximum(x @ w1.T + b1, 0.0) @ w2.T + b2


if __name__ == "__main__":
    key = jax.random.PRNGKey(0)
    k1, k2, k3, kp = jax.random.split(key, 4)
    w1, b1, w2, b2 = init_params(kp)

    # 1) PyTorch-convention compatibility path, tiny batch (single padded tile).
    x = jax.random.normal(k1, (8, INPUT_DIM), jnp.float32)
    out = jax.block_until_ready(pinn_forward(x, w1, b1, w2, b2))
    ref = _reference(x, w1, b1, w2, b2)
    assert out.shape == (8, OUTPUT_DIM)
    assert jnp.allclose(out, ref, atol=1e-4, rtol=1e-5)

    # 2) Feature-major fast path: ragged batch + multi-tile grid.
    x_fm = jax.random.normal(k2, (INPUT_DIM, 300), jnp.float32)
    out2 = jax.block_until_ready(
        pinn_forward_feature_major(x_fm, w1, b1, w2, b2, block_b=128))
    ref2 = _reference(x_fm.T, w1, b1, w2, b2)
    assert out2.shape == (300, OUTPUT_DIM)
    assert jnp.allclose(out2, ref2, atol=1e-4, rtol=1e-5)

    # 3) Feature-major fast path: batch large enough to trigger the >=2-tile
    #    (v7x megacore) split with the default tile size; no padding copy.
    x_fm3 = jax.random.normal(k3, (INPUT_DIM, 512), jnp.float32)
    out3 = jax.block_until_ready(
        pinn_forward_feature_major(x_fm3, w1, b1, w2, b2))
    ref3 = _reference(x_fm3.T, w1, b1, w2, b2)
    assert out3.shape == (512, OUTPUT_DIM)
    assert jnp.allclose(out3, ref3, atol=1e-4, rtol=1e-5)

    print("KERNEL_OK")
</pallas_src>

<mosaic_0001>
module attributes {stable_mosaic.version = 11 : i64} {
  func.func @_pinn_kernel(%arg0: i32, %arg1: memref<12x128xf32, #tpu.memory_space<vmem>>, %arg2: memref<64x12xf32, #tpu.memory_space<vmem>>, %arg3: memref<64x1xf32, #tpu.memory_space<vmem>>, %arg4: memref<1x64xf32, #tpu.memory_space<vmem>>, %arg5: memref<1x1xf32, #tpu.memory_space<vmem>>, %arg6: memref<1x128xf32, #tpu.memory_space<vmem>>) attributes {dimension_semantics = [#tpu.dimension_semantics<parallel>], iteration_bounds = array<i64: 1>, scalar_prefetch = 0 : i64, scratch_operands = 0 : i64, tpu.core_type = #tpu.core_type<tc>, window_params = [{transform_indices = @transform_0, window_bounds = array<i64: 12, 128>}, {pipeline_mode = #tpu.pipeline_mode<synchronous>, transform_indices = @transform_1, window_bounds = array<i64: 64, 12>}, {pipeline_mode = #tpu.pipeline_mode<synchronous>, transform_indices = @transform_2, window_bounds = array<i64: 64, 1>}, {pipeline_mode = #tpu.pipeline_mode<synchronous>, transform_indices = @transform_3, window_bounds = array<i64: 1, 64>}, {pipeline_mode = #tpu.pipeline_mode<synchronous>, transform_indices = @transform_4, window_bounds = array<i64: 1, 1>}, {transform_indices = @transform_5, window_bounds = array<i64: 1, 128>}]} {
    %c0 = arith.constant 0 : index
    %c0_0 = arith.constant 0 : index
    %0 = vector.load %arg1[%c0, %c0_0] : memref<12x128xf32, #tpu.memory_space<vmem>>, vector<12x128xf32>
    %c0_1 = arith.constant 0 : index
    %c0_2 = arith.constant 0 : index
    %1 = vector.load %arg2[%c0_1, %c0_2] : memref<64x12xf32, #tpu.memory_space<vmem>>, vector<64x12xf32>
    %cst = arith.constant dense<0.000000e+00> : vector<64x128xf32>
    %2 = tpu.matmul %1, %0, %cst {dimension_numbers = #tpu.dot_dimension_numbers<[1], [0], [0], [1], [0, 0, 1, 1], [], []>} : vector<64x12xf32>, vector<12x128xf32>, vector<64x128xf32> -> vector<64x128xf32>
    %c0_3 = arith.constant 0 : index
    %c0_4 = arith.constant 0 : index
    %3 = vector.load %arg3[%c0_3, %c0_4] : memref<64x1xf32, #tpu.memory_space<vmem>>, vector<64x1xf32>
    %4 = vector.broadcast %3 : vector<64x1xf32> to vector<64x128xf32>
    %5 = arith.addf %2, %4 : vector<64x128xf32>
    %cst_5 = arith.constant 0.000000e+00 : f32
    %6 = vector.broadcast %cst_5 : f32 to vector<64x128xf32>
    %7 = arith.maximumf %5, %6 : vector<64x128xf32>
    %c0_6 = arith.constant 0 : index
    %c0_7 = arith.constant 0 : index
    %8 = vector.load %arg4[%c0_6, %c0_7] : memref<1x64xf32, #tpu.memory_space<vmem>>, vector<1x64xf32>
    %cst_8 = arith.constant dense<0.000000e+00> : vector<1x128xf32>
    %9 = tpu.matmul %8, %7, %cst_8 {dimension_numbers = #tpu.dot_dimension_numbers<[1], [0], [0], [1], [0, 0, 1, 1], [], []>} : vector<1x64xf32>, vector<64x128xf32>, vector<1x128xf32> -> vector<1x128xf32>
    %c0_9 = arith.constant 0 : index
    %c0_10 = arith.constant 0 : index
    %10 = vector.load %arg5[%c0_9, %c0_10] : memref<1x1xf32, #tpu.memory_space<vmem>>, vector<1x1xf32>
    %11 = vector.broadcast %10 : vector<1x1xf32> to vector<1x128xf32>
    %12 = arith.addf %9, %11 : vector<1x128xf32>
    %c0_11 = arith.constant 0 : index
    %c0_12 = arith.constant 0 : index
    %13 = vector.load %arg6[%c0_11, %c0_12] : memref<1x128xf32, #tpu.memory_space<vmem>>, vector<1x128xf32>
    tpu.vector_store %arg6[%c0_11, %c0_12], %12 {strides = array<i32>} : memref<1x128xf32, #tpu.memory_space<vmem>>, vector<1x128xf32>,
    return
  }
  func.func @transform_0(%arg0: i32) -> (i32, i32) {
    %c0_i32 = arith.constant 0 : i32
    %c0_i32_0 = arith.constant 0 : i32
    return %c0_i32, %arg0 : i32, i32
  }
  func.func @transform_1(%arg0: i32) -> (i32, i32) {
    %c0_i32 = arith.constant 0 : i32
    %c0_i32_0 = arith.constant 0 : i32
    %c0_i32_1 = arith.constant 0 : i32
    return %c0_i32, %c0_i32_0 : i32, i32
  }
  func.func @transform_2(%arg0: i32) -> (i32, i32) {
    %c0_i32 = arith.constant 0 : i32
    %c0_i32_0 = arith.constant 0 : i32
    %c0_i32_1 = arith.constant 0 : i32
    return %c0_i32, %c0_i32_0 : i32, i32
  }
  func.func @transform_3(%arg0: i32) -> (i32, i32) {
    %c0_i32 = arith.constant 0 : i32
    %c0_i32_0 = arith.constant 0 : i32
    %c0_i32_1 = arith.constant 0 : i32
    return %c0_i32, %c0_i32_0 : i32, i32
  }
  func.func @transform_4(%arg0: i32) -> (i32, i32) {
    %c0_i32 = arith.constant 0 : i32
    %c0_i32_0 = arith.constant 0 : i32
    %c0_i32_1 = arith.constant 0 : i32
    return %c0_i32, %c0_i32_0 : i32, i32
  }
  func.func @transform_5(%arg0: i32) -> (i32, i32) {
    %c0_i32 = arith.constant 0 : i32
    %c0_i32_0 = arith.constant 0 : i32
    return %c0_i32, %arg0 : i32, i32
  }
}

</mosaic_0001>

<llo_original>
// kernel: tpu_custom_call.1
$region0: #{tpu_custom_call.1}
  #allocation0 [shape = 'u32[]', space=smem, size = 0x4, offset = 0x4, fixed_abs, tag = 'smem constant byte address 0x4 - core index']
  #allocation1 [shape = 'u32[72,128]{1,0:T(1,128)}', space=vmem, size = 0x9000, scoped, tag = 'internal scratch']
  #allocation2 [shape = 'f32[1,1]{1,0:T(1,128)S(1)}', space=vmem, size = 0x200, scoped, tag = 'scoped memory for tpu_custom_call.1']
  %s0 = inlined_call_operand.vmem [shape: f32[12,128], index: 0, kind: input, shape index: {}]
  %s1 = inlined_call_operand.vmem [shape: f32[64,12], index: 1, kind: input, shape index: {}]
  %s2 = inlined_call_operand.vmem [shape: f32[64,1], index: 2, kind: input, shape index: {}]
  %s3 = inlined_call_operand.vmem [shape: f32[1,64], index: 3, kind: input, shape index: {}]
  %s4 = inlined_call_operand.<no memory space> [shape: f32[1,1], index: 4, kind: input, shape index: {}]
  %s5 = inlined_call_operand.hbm [shape: f32[1,128], index: 5, kind: output, shape index: {}]
  %s6 = sld [smem:[#allocation0]]
  $region30: #{tpu_custom_call.1} parent=0
    _
  %s8 = ssub.s32 1, %s6
  %s9 = scalar_select 0, %s8, %s6
  %v10 = vstv %s4
  %11 = vst [vmem:[#allocation2] sm:$0x1] %v10
  $region1: #{tpu_custom_call.1} parent=0
    #allocation3 [shape = 'u8[512]{0}', space=vmem, size = 0x400, scoped, tag = 'output window, operand 0, single buffered']
    #allocation4 [shape = 's32[1]{0}', space=sflag, size = 0x4, scoped, tag = 'scoped memory for tpu_custom_call.1']
    %12 = vsyncpa [#allocation4], 0
    // Predicated region
    $region2: #{tpu_custom_call.1} parent=1 // pred_check
      _
    $region3: #{tpu_custom_call.1} parent=1 // pred_check_branch
      %14 = sbr.rel (0) target = $region5
    $region4: #{tpu_custom_call.1} parent=1 // pred_region
      _
    $region5: #{tpu_custom_call.1} parent=1 // pred_fallthru
      _
    // Predicated region
    $region6: #{tpu_custom_call.1} parent=1 // pred_check
      _
    $region7: #{tpu_custom_call.1} parent=1 // pred_check_branch
      %16 = sbr.rel (0) target = $region9
    $region8: #{tpu_custom_call.1} parent=1 // pred_region
      _
    $region9: #{tpu_custom_call.1} parent=1 // pred_fallthru
      _
    // Predicated region
    $region10: #{tpu_custom_call.1} parent=1 // pred_check
      _
    $region11: #{tpu_custom_call.1} parent=1 // pred_check_branch
      %18 = sbr.rel (0) target = $region13
    $region12: #{tpu_custom_call.1} parent=1 // pred_region
      _
    $region13: #{tpu_custom_call.1} parent=1 // pred_fallthru
      _
    // Predicated region
    $region14: #{tpu_custom_call.1} parent=1 // pred_check
      _
    $region15: #{tpu_custom_call.1} parent=1 // pred_check_branch
      %20 = sbr.rel (0) target = $region17
    $region16: #{tpu_custom_call.1} parent=1 // pred_region
      _
    $region17: #{tpu_custom_call.1} parent=1 // pred_fallthru
      _
    // Predicated region
    $region18: #{tpu_custom_call.1} parent=1 // pred_check
      _
    $region19: #{tpu_custom_call.1} parent=1 // pred_check_branch
      %22 = sbr.rel (0) target = $region21
    $region20: #{tpu_custom_call.1} parent=1 // pred_region
      _
    $region21: #{tpu_custom_call.1} parent=1 // pred_fallthru
      _
    %v23 = vld [vmem:[%s0] sm:$0xff]
    %v24 = vld [vmem:[%s0 + $0x8] sm:$0xf]
    %v25 = vld [vmem:[%s1] sm:$0xff]
    %v26 = vld [vmem:[%s1 + $0x8] sm:$0xff]
    %v27 = vld [vmem:[%s1 + $0x10] sm:$0xff]
    %v28 = vld [vmem:[%s1 + $0x18] sm:$0xff]
    %v29 = vld [vmem:[%s1 + $0x20] sm:$0xff]
    %v30 = vld [vmem:[%s1 + $0x28] sm:$0xff]
    %v31 = vld [vmem:[%s1 + $0x30] sm:$0xff]
    %v32 = vld [vmem:[%s1 + $0x38] sm:$0xff]
    %v33 = vld [vmem:[%s2] sm:$0xff]
    %v34 = vld [vmem:[%s2 + $0x8] sm:$0xff]
    %v35 = vld [vmem:[%s2 + $0x10] sm:$0xff]
    %v36 = vld [vmem:[%s2 + $0x18] sm:$0xff]
    %v37 = vld [vmem:[%s2 + $0x20] sm:$0xff]
    %v38 = vld [vmem:[%s2 + $0x28] sm:$0xff]
    %v39 = vld [vmem:[%s2 + $0x30] sm:$0xff]
    %v40 = vld [vmem:[%s2 + $0x38] sm:$0xff]
    %42 = vset.pattern.permute.xlu0 0
    %43 = vperm.xlu0 %42, %v33
    %v44 = vpop.permute.xlu0 %43
    %47 = vset.pattern.permute.xlu0 0
    %48 = vperm.xlu0 %47, %v34
    %v49 = vpop.permute.xlu0 %48
    %52 = vset.pattern.permute.xlu0 0
    %53 = vperm.xlu0 %52, %v35
    %v54 = vpop.permute.xlu0 %53
    %57 = vset.pattern.permute.xlu0 0
    %58 = vperm.xlu0 %57, %v36
    %v59 = vpop.permute.xlu0 %58
    %62 = vset.pattern.permute.xlu0 0
    %63 = vperm.xlu0 %62, %v37
    %v64 = vpop.permute.xlu0 %63
    %67 = vset.pattern.permute.xlu0 0
    %68 = vperm.xlu0 %67, %v38
    %v69 = vpop.permute.xlu0 %68
    %72 = vset.pattern.permute.xlu0 0
    %73 = vperm.xlu0 %72, %v39
    %v74 = vpop.permute.xlu0 %73
    %77 = vset.pattern.permute.xlu0 0
    %78 = vperm.xlu0 %77, %v40
    %v79 = vpop.permute.xlu0 %78
    %vm81 = vcmask 97280
    %v83 = vsel %vm81, %v25, 0
    %v86 = vsel %vm81, %v26, 0
    %v89 = vsel %vm81, %v27, 0
    %v92 = vsel %vm81, %v28, 0
    %v95 = vsel %vm81, %v29, 0
    %v98 = vsel %vm81, %v30, 0
    %v101 = vsel %vm81, %v31, 0
    %v104 = vsel %vm81, %v32, 0
    %vm106 = vcmask 1043456
    %v108 = vsel %vm106, %v24, 0
    %110 = vmatpush.msra.mxu0 0.0
    %111 = vmatpush.msra.mxu0 0.0
    %112 = vmatpush.msra.mxu0 0.0
    %113 = vmatpush.msra.mxu0 0.0
    %114 = vmatpush.msra.mxu0 0.0
    %115 = vmatpush.msra.mxu0 0.0
    %116 = vmatpush.msra.mxu0 0.0
    %117 = vmatpush.msra.mxu0 0.0
    %118 = vmatpush.msra.mxu0 0.0
    %119 = vmatpush.msra.mxu0 0.0
    %120 = vmatpush.msra.mxu0 0.0
    %121 = vmatpush.msra.mxu0 0.0
    %122 = vmatpush.msra.mxu0 0.0
    %123 = vmatpush.msra.mxu0 0.0
    %124 = vmatpush.msra.mxu0 %v108
    %125 = vmatpush.msra.mxu0 %v23
    %126 = vmatmul.f32.gmra.mxu0 %v83
    %v127 = vpop.f32.mrf.mxu0
    %v128 = vadd.f32 %v44, %v127
    %129 = vmatmul.f32.gmra.mxu0 %v86
    %v130 = vpop.f32.mrf.mxu0
    %v131 = vadd.f32 %v49, %v130
    %132 = vmatmul.f32.gmra.mxu0 %v89
    %v133 = vpop.f32.mrf.mxu0
    %v134 = vadd.f32 %v54, %v133
    %135 = vmatmul.f32.gmra.mxu0 %v92
    %v136 = vpop.f32.mrf.mxu0
    %v137 = vadd.f32 %v59, %v136
    %138 = vmatmul.f32.gmra.mxu0 %v95
    %v139 = vpop.f32.mrf.mxu0
    %v140 = vadd.f32 %v64, %v139
    %141 = vmatmul.f32.gmra.mxu0 %v98
    %v142 = vpop.f32.mrf.mxu0
    %v143 = vadd.f32 %v69, %v142
    %144 = vmatmul.f32.gmra.mxu0 %v101
    %v145 = vpop.f32.mrf.mxu0
    %v146 = vadd.f32 %v74, %v145
    %147 = vmatmul.f32.gmra.mxu0 %v104
    %v148 = vpop.f32.mrf.mxu0
    %v149 = vadd.f32 %v79, %v148
    %150 = vdwg.mxu0
    %v151 = vmax.f32 %v128, 0.0
    %v152 = vmax.f32 %v131, 0.0
    %v153 = vmax.f32 %v134, 0.0
    %v154 = vmax.f32 %v137, 0.0
    %v155 = vmax.f32 %v140, 0.0
    %v156 = vmax.f32 %v143, 0.0
    %v157 = vmax.f32 %v146, 0.0
    %v158 = vmax.f32 %v149, 0.0
    %v159 = vld [vmem:[%s3] sm:$0x1]
    %v160 = vld [vmem:[#allocation2] sm:$0x1]
    %162 = vset.pattern.permute.xlu0 0
    %163 = vperm.xlu0 %162, %v160
    %v164 = vpop.permute.xlu0 %163
    %v166 = vperm.slane %v164, 0
    %vm167 = vcmask 523264
    %v169 = vsel %vm167, %v159, 0
    %171 = vmatpush.msra.mxu0 0.0
    %172 = vmatpush.msra.mxu0 0.0
    %173 = vmatpush.msra.mxu0 0.0
    %174 = vmatpush.msra.mxu0 0.0
    %175 = vmatpush.msra.mxu0 0.0
    %176 = vmatpush.msra.mxu0 0.0
    %177 = vmatpush.msra.mxu0 0.0
    %178 = vmatpush.msra.mxu0 0.0
    %179 = vmatpush.msra.mxu0 %v158
    %180 = vmatpush.msra.mxu0 %v157
    %181 = vmatpush.msra.mxu0 %v156
    %182 = vmatpush.msra.mxu0 %v155
    %183 = vmatpush.msra.mxu0 %v154
    %184 = vmatpush.msra.mxu0 %v153
    %185 = vmatpush.msra.mxu0 %v152
    %186 = vmatpush.msra.mxu0 %v151
    %187 = vmatmul.f32.gmra.mxu0 %v169
    %v188 = vpop.f32.mrf.mxu0
    %v189 = vadd.f32 %v166, %v188
    %190 = vdwg.mxu0
    %191 = vst [vmem:[#allocation3] sm:$0x1] %v189
    // Predicated region
    $region22: #{tpu_custom_call.1} parent=1 // pred_check
      _
    $region23: #{tpu_custom_call.1} parent=1 // pred_check_branch
      %193 = sbr.rel (0) target = $region25
    $region24: #{tpu_custom_call.1} parent=1 // pred_region
      %195 = vsyncadd [#allocation4], 0
      %s197 = sshll.u32 [#allocation3], 4
      %s198 = int_to_ptr.vmem [resolvable:$true] %s197
      %s199 = sshll.u32 %s5, 4
      %s200 = int_to_ptr.hbm [resolvable:$true] %s199
      %202 = dma.vmem_to_hbm [thread:$0]  %s198, 16, %s200, [#allocation4]
    $region25: #{tpu_custom_call.1} parent=1 // pred_fallthru
      _
    // Predicated region
    $region26: #{tpu_custom_call.1} parent=1 // pred_check
      _
    $region27: #{tpu_custom_call.1} parent=1 // pred_check_branch
      %204 = sbr.rel (0) target = $region29
    $region28: #{tpu_custom_call.1} parent=1 // pred_region
      %206 = dma.done [#allocation4], 16
    $region29: #{tpu_custom_call.1} parent=1 // pred_fallthru
      _
    %207 = vsyncpa [#allocation4], 1

</llo_original>
